<compile_context>
chip_gen: v5e
topology: v5e:2x2
jax: 0.10.0
libtpu: 0.0.40
codegen_flags: <defaults>
</compile_context>

<pallas_src>
import functools

import jax
import jax.numpy as jnp
from jax.experimental import pallas as pl
from jax.experimental.pallas import tpu as pltpu


def _round_up(x, m):
    return (x + m - 1) // m * m


def _pick_tile(total, cap):
    """Largest multiple of 128 that divides `total` and is <= cap (min 128)."""
    best = 128
    c = 128
    while c <= min(cap, total):
        if total % c == 0:
            best = c
        c += 128
    return best


# ---------------------------------------------------------------------------
# Kernel 1: fused projection   lr = x @ [Wl@Wm | Wr] + [bl@Wm | br]
# ---------------------------------------------------------------------------
def _proj_kernel(x_ref, w_ref, b_ref, lr_ref):
    # x: (tm, F)   w: (F, 2D)   b: (1, 2D) f32   lr: (tm, 2D)
    acc = jnp.dot(x_ref[...], w_ref[...], preferred_element_type=jnp.float32)
    lr_ref[...] = (acc + b_ref[...]).astype(lr_ref.dtype)


def fused_projection(x, w, b, *, tm, out_dtype):
    Np, F = x.shape
    D2 = w.shape[1]
    assert Np % tm == 0
    cost = pl.CostEstimate(
        flops=2 * Np * F * D2,
        transcendentals=0,
        bytes_accessed=(Np * F * x.dtype.itemsize + F * D2 * w.dtype.itemsize
                        + D2 * 4 + Np * D2 * jnp.dtype(out_dtype).itemsize))
    # TODO(synk): on VMEM-tight v7x configs the invariant weight/bias inputs
    # could be single-buffered via pipeline_mode=pl.Buffered(1); with mid_w
    # folded away and bf16 weights the footprint here is already tiny.
    return pl.pallas_call(
        _proj_kernel,
        out_shape=jax.ShapeDtypeStruct((Np, D2), out_dtype),
        grid_spec=pltpu.PrefetchScalarGridSpec(
            num_scalar_prefetch=0,
            grid=(Np // tm,),
            in_specs=[
                pl.BlockSpec((tm, F), lambda i: (i, 0)),
                pl.BlockSpec((F, D2), lambda i: (0, 0)),   # weights VMEM-resident
                pl.BlockSpec((1, D2), lambda i: (0, 0)),
            ],
            out_specs=pl.BlockSpec((tm, D2), lambda i: (i, 0))),
        compiler_params=pltpu.CompilerParams(
            dimension_semantics=("parallel",)),
        cost_estimate=cost,
    )(x, w, b)


# ---------------------------------------------------------------------------
# Kernel 2: gram + sigmoid   out = sigmoid(lm @ r.T)
# ---------------------------------------------------------------------------
def _gram_kernel(lm_ref, r_ref, o_ref):
    # lm: (tm, D)   r: (tn_or_Np, D)   o: (tm, tn_or_Np)
    # Contraction over the shared last dim (same pattern as flash-attn QK^T).
    s = jax.lax.dot_general(lm_ref[...], r_ref[...],
                            (((1,), (1,)), ((), ())),
                            preferred_element_type=jnp.float32)
    # sigmoid(s) = 0.5*tanh(0.5*s)+0.5 : one EUP op, no divide / exp overflow.
    o_ref[...] = (0.5 * jnp.tanh(0.5 * s) + 0.5).astype(o_ref.dtype)


def gram_sigmoid(lr, D, *, vmem_budget_bytes=20 * 1024 * 1024):
    # `lr` is the fused (Np, 2D) projection output; cols [0:D] = lm = L(x)@Mid,
    # cols [D:2D] = r = R(x).  Both views are sliced purely via BlockSpecs.
    Np, D2 = lr.shape
    assert D2 == 2 * D
    isz = lr.dtype.itemsize

    tm = _pick_tile(Np, max(128, min(256, Np // 2)) if Np >= 256 else Np)
    cost = pl.CostEstimate(
        flops=2 * Np * Np * D + 4 * Np * Np,
        transcendentals=Np * Np,
        bytes_accessed=2 * Np * D * isz + Np * Np * 4)

    # VMEM for the resident-r variant (double-buffered blocks + f32 out slab).
    resident_bytes = 2 * (tm * D * isz + Np * D * isz + tm * Np * 4)
    if resident_bytes <= vmem_budget_bytes:
        # Variant A: full r kept VMEM-resident; (tm, Np) lane-dense row slabs.
        return pl.pallas_call(
            _gram_kernel,
            out_shape=jax.ShapeDtypeStruct((Np, Np), jnp.float32),
            grid_spec=pltpu.PrefetchScalarGridSpec(
                num_scalar_prefetch=0,
                grid=(Np // tm,),
                in_specs=[
                    pl.BlockSpec((tm, D), lambda i: (i, 0)),   # lm row block
                    pl.BlockSpec((Np, D), lambda i: (0, 1)),   # full r, resident
                ],
                out_specs=pl.BlockSpec((tm, Np), lambda i: (i, 0))),
            compiler_params=pltpu.CompilerParams(
                dimension_semantics=("parallel",)),
            cost_estimate=cost,
        )(lr, lr)

    # Variant B: 2-D grid, large tiles (HBM re-reads scale as 1/tm + 1/tn).
    tn = _pick_tile(Np, 512)
    return pl.pallas_call(
        _gram_kernel,
        out_shape=jax.ShapeDtypeStruct((Np, Np), jnp.float32),
        grid_spec=pltpu.PrefetchScalarGridSpec(
            num_scalar_prefetch=0,
            grid=(Np // tm, Np // tn),
            in_specs=[
                pl.BlockSpec((tm, D), lambda i, j: (i, 0)),
                pl.BlockSpec((tn, D), lambda i, j: (j, 1)),
            ],
            out_specs=pl.BlockSpec((tm, tn), lambda i, j: (i, j))),
        compiler_params=pltpu.CompilerParams(
            dimension_semantics=("parallel", "parallel")),
        cost_estimate=cost,
    )(lr, lr)


# ---------------------------------------------------------------------------
# Forward wrapper
# ---------------------------------------------------------------------------
def measure_model_forward(x, params, *, compute_dtype=jnp.bfloat16):
    """Pallas forward for MeasureModel: sigmoid(L(x) @ Mid.weight @ R(x).T)."""
    N, F = x.shape
    D = params["mid_w"].shape[0]
    assert params["l_w"].shape == (F, D) and params["r_w"].shape == (F, D)

    hp = jax.lax.Precision.HIGHEST
    # Fold Mid into L once (one small f32 GEMM, outside the kernels):
    #   (x@Wl + bl)@Wm == x@(Wl@Wm) + bl@Wm
    wl_m = jnp.dot(params["l_w"], params["mid_w"], precision=hp)
    bl_m = jnp.dot(params["l_b"], params["mid_w"], precision=hp)
    # Fuse both projections into one (F, 2D) weight -> one MXU launch per tile.
    w = jnp.concatenate([wl_m, params["r_w"]], axis=1).astype(compute_dtype)
    b = jnp.concatenate([bl_m, params["r_b"]]).reshape(1, 2 * D).astype(jnp.float32)

    # Pad batch only to a multiple of 128 (keeps the gram output lane-dense).
    Np = _round_up(N, 128)
    xp = jnp.pad(x, ((0, Np - N), (0, 0))).astype(compute_dtype)

    tm1 = _pick_tile(Np, max(128, min(512, Np // 2)) if Np >= 256 else Np)
    lr = fused_projection(xp, w, b, tm=tm1, out_dtype=compute_dtype)
    out = gram_sigmoid(lr, D)
    # NOTE: padded rows carry bias-propagated garbage; they are sliced off here
    # and must never be reduced over before this slice.
    return out[:N, :N]


def reference_forward(x, params):
    hp = jax.lax.Precision.HIGHEST
    a = jnp.dot(x, params["l_w"], precision=hp) + params["l_b"]
    r = jnp.dot(x, params["r_w"], precision=hp) + params["r_b"]
    m = jnp.dot(a, params["mid_w"], precision=hp)
    s = jnp.dot(m, r.T, precision=hp)
    return jax.nn.sigmoid(s)


def init_params(key, in_features, latent):
    ks = jax.random.split(key, 5)
    s_in = 1.0 / jnp.sqrt(float(in_features))
    s_lat = 1.0 / jnp.sqrt(float(latent))
    return {
        # torch Linear weight is (out, in); stored transposed here as (in, out).
        "l_w": jax.random.normal(ks[0], (in_features, latent), jnp.float32) * s_in,
        "l_b": 0.1 * jax.random.normal(ks[1], (latent,), jnp.float32),
        # Exactly torch's self.Mid.weight (a (D, D) matrix, right-multiplied raw).
        "mid_w": jax.random.normal(ks[2], (latent, latent), jnp.float32) * s_lat,
        "r_w": jax.random.normal(ks[3], (in_features, latent), jnp.float32) * s_in,
        "r_b": 0.1 * jax.random.normal(ks[4], (latent,), jnp.float32),
    }


if __name__ == "__main__":
    key = jax.random.PRNGKey(0)
    k_param, k_x = jax.random.split(key)

    N, F, latent = 8, 32, 256    # small demo shapes; latnet_shape default = 256
    params = init_params(k_param, F, latent)
    x = jax.random.normal(k_x, (N, F), jnp.float32)

    ref = jax.block_until_ready(reference_forward(x, params))

    # f32 compute path: tight structural check (mid-fold, fused projection,
    # resident-r gram) against the unfused reference.
    fwd_f32 = jax.jit(functools.partial(measure_model_forward,
                                        compute_dtype=jnp.float32))
    out_f32 = jax.block_until_ready(fwd_f32(x, params))
    assert out_f32.shape == (N, N) and out_f32.dtype == jnp.float32
    err_f32 = float(jnp.max(jnp.abs(out_f32 - ref)))
    assert err_f32 < 5e-3, err_f32

    # Default bf16-MXU path (f32 accumulation): looser numeric tolerance since
    # lm/r are rounded to bf16 before the D=256 contraction.
    fwd_bf16 = jax.jit(measure_model_forward)
    out_bf16 = jax.block_until_ready(fwd_bf16(x, params))
    assert out_bf16.shape == (N, N) and out_bf16.dtype == jnp.float32
    err_bf16 = float(jnp.max(jnp.abs(out_bf16 - ref)))
    assert err_bf16 < 3e-2, err_bf16

    print("KERNEL_OK")
</pallas_src>

<mosaic_0001>
module attributes {stable_mosaic.version = 11 : i64} {
  func.func @_proj_kernel(%arg0: i32, %arg1: memref<128x32xf32, #tpu.memory_space<vmem>>, %arg2: memref<32x512xf32, #tpu.memory_space<vmem>>, %arg3: memref<1x512xf32, #tpu.memory_space<vmem>>, %arg4: memref<128x512xf32, #tpu.memory_space<vmem>>) attributes {dimension_semantics = [#tpu.dimension_semantics<parallel>], iteration_bounds = array<i64: 1>, scalar_prefetch = 0 : i64, scratch_operands = 0 : i64, tpu.core_type = #tpu.core_type<tc>, window_params = [{transform_indices = @transform_0, window_bounds = array<i64: 128, 32>}, {pipeline_mode = #tpu.pipeline_mode<synchronous>, transform_indices = @transform_1, window_bounds = array<i64: 32, 512>}, {pipeline_mode = #tpu.pipeline_mode<synchronous>, transform_indices = @transform_2, window_bounds = array<i64: 1, 512>}, {transform_indices = @transform_3, window_bounds = array<i64: 128, 512>}]} {
    %c0 = arith.constant 0 : index
    %c0_0 = arith.constant 0 : index
    %0 = vector.load %arg1[%c0, %c0_0] : memref<128x32xf32, #tpu.memory_space<vmem>>, vector<128x32xf32>
    %c0_1 = arith.constant 0 : index
    %c0_2 = arith.constant 0 : index
    %1 = vector.load %arg2[%c0_1, %c0_2] : memref<32x512xf32, #tpu.memory_space<vmem>>, vector<32x512xf32>
    %cst = arith.constant dense<0.000000e+00> : vector<128x512xf32>
    %2 = tpu.matmul %0, %1, %cst {dimension_numbers = #tpu.dot_dimension_numbers<[1], [0], [0], [1], [0, 0, 1, 1], [], []>} : vector<128x32xf32>, vector<32x512xf32>, vector<128x512xf32> -> vector<128x512xf32>
    %c0_3 = arith.constant 0 : index
    %c0_4 = arith.constant 0 : index
    %3 = vector.load %arg3[%c0_3, %c0_4] : memref<1x512xf32, #tpu.memory_space<vmem>>, vector<1x512xf32>
    %4 = vector.broadcast %3 : vector<1x512xf32> to vector<128x512xf32>
    %5 = arith.addf %2, %4 : vector<128x512xf32>
    %c0_5 = arith.constant 0 : index
    %c0_6 = arith.constant 0 : index
    %6 = vector.load %arg4[%c0_5, %c0_6] : memref<128x512xf32, #tpu.memory_space<vmem>>, vector<128x512xf32>
    tpu.vector_store %arg4[%c0_5, %c0_6], %5 {strides = array<i32>} : memref<128x512xf32, #tpu.memory_space<vmem>>, vector<128x512xf32>,
    return
  }
  func.func @transform_0(%arg0: i32) -> (i32, i32) {
    %c0_i32 = arith.constant 0 : i32
    %c0_i32_0 = arith.constant 0 : i32
    return %arg0, %c0_i32 : i32, i32
  }
  func.func @transform_1(%arg0: i32) -> (i32, i32) {
    %c0_i32 = arith.constant 0 : i32
    %c0_i32_0 = arith.constant 0 : i32
    %c0_i32_1 = arith.constant 0 : i32
    return %c0_i32, %c0_i32_0 : i32, i32
  }
  func.func @transform_2(%arg0: i32) -> (i32, i32) {
    %c0_i32 = arith.constant 0 : i32
    %c0_i32_0 = arith.constant 0 : i32
    %c0_i32_1 = arith.constant 0 : i32
    return %c0_i32, %c0_i32_0 : i32, i32
  }
  func.func @transform_3(%arg0: i32) -> (i32, i32) {
    %c0_i32 = arith.constant 0 : i32
    %c0_i32_0 = arith.constant 0 : i32
    return %arg0, %c0_i32 : i32, i32
  }
}

module attributes {stable_mosaic.version = 11 : i64} {
  func.func @_gram_kernel(%arg0: i32, %arg1: memref<128x256xf32, #tpu.memory_space<vmem>>, %arg2: memref<128x256xf32, #tpu.memory_space<vmem>>, %arg3: memref<128x128xf32, #tpu.memory_space<vmem>>) attributes {dimension_semantics = [#tpu.dimension_semantics<parallel>], iteration_bounds = array<i64: 1>, scalar_prefetch = 0 : i64, scratch_operands = 0 : i64, tpu.core_type = #tpu.core_type<tc>, window_params = [{transform_indices = @transform_0, window_bounds = array<i64: 128, 256>}, {transform_indices = @transform_1, window_bounds = array<i64: 128, 256>}, {transform_indices = @transform_2, window_bounds = array<i64: 128, 128>}]} {
    %c0 = arith.constant 0 : index
    %c0_0 = arith.constant 0 : index
    %0 = vector.load %arg1[%c0, %c0_0] : memref<128x256xf32, #tpu.memory_space<vmem>>, vector<128x256xf32>
    %c0_1 = arith.constant 0 : index
    %c0_2 = arith.constant 0 : index
    %1 = vector.load %arg2[%c0_1, %c0_2] : memref<128x256xf32, #tpu.memory_space<vmem>>, vector<128x256xf32>
    %cst = arith.constant dense<0.000000e+00> : vector<128x128xf32>
    %2 = tpu.matmul %0, %1, %cst {dimension_numbers = #tpu.dot_dimension_numbers<[1], [1], [0], [0], [0, 0, 1, 0], [], []>} : vector<128x256xf32>, vector<128x256xf32>, vector<128x128xf32> -> vector<128x128xf32>
    %cst_3 = arith.constant 5.000000e-01 : f32
    %3 = vector.broadcast %cst_3 : f32 to vector<128x128xf32>
    %4 = arith.mulf %3, %2 : vector<128x128xf32>
    %5 = math.tanh %4 : vector<128x128xf32>
    %cst_4 = arith.constant 5.000000e-01 : f32
    %6 = vector.broadcast %cst_4 : f32 to vector<128x128xf32>
    %7 = arith.mulf %6, %5 : vector<128x128xf32>
    %cst_5 = arith.constant 5.000000e-01 : f32
    %8 = vector.broadcast %cst_5 : f32 to vector<128x128xf32>
    %9 = arith.addf %7, %8 : vector<128x128xf32>
    %c0_6 = arith.constant 0 : index
    %c0_7 = arith.constant 0 : index
    %10 = vector.load %arg3[%c0_6, %c0_7] : memref<128x128xf32, #tpu.memory_space<vmem>>, vector<128x128xf32>
    tpu.vector_store %arg3[%c0_6, %c0_7], %9 {strides = array<i32>} : memref<128x128xf32, #tpu.memory_space<vmem>>, vector<128x128xf32>,
    return
  }
  func.func @transform_0(%arg0: i32) -> (i32, i32) {
    %c0_i32 = arith.constant 0 : i32
    %c0_i32_0 = arith.constant 0 : i32
    return %arg0, %c0_i32 : i32, i32
  }
  func.func @transform_1(%arg0: i32) -> (i32, i32) {
    %c0_i32 = arith.constant 0 : i32
    %c1_i32 = arith.constant 1 : i32
    %c0_i32_0 = arith.constant 0 : i32
    return %c0_i32, %c1_i32 : i32, i32
  }
  func.func @transform_2(%arg0: i32) -> (i32, i32) {
    %c0_i32 = arith.constant 0 : i32
    %c0_i32_0 = arith.constant 0 : i32
    return %arg0, %c0_i32 : i32, i32
  }
}

</mosaic_0001>

<llo_original>
// kernel: measure_model_forward.3
$region0: #{measure_model_forward.3}
  #allocation0 [shape = 'u32[]', space=smem, size = 0x4, offset = 0x4, fixed_abs, tag = 'smem constant byte address 0x4 - core index']
  #allocation1 [shape = 'u32[72,128]{1,0:T(1,128)}', space=vmem, size = 0x9000, scoped, tag = 'internal scratch']
  %s0 = inlined_call_operand.vmem [shape: f32[128,512], index: 0, kind: input, shape index: {}, may-alias: {0,1}]
  %s1 = inlined_call_operand.vmem [shape: f32[128,512], index: 1, kind: input, shape index: {}, may-alias: {0,1}]
  %s2 = inlined_call_operand.vmem [shape: f32[128,128], index: 2, kind: output, shape index: {}]
  %s3 = sld [smem:[#allocation0]]
  $region64: #{measure_model_forward.3} parent=0
    _
  %s5 = ssub.s32 1, %s3
  %s6 = scalar_select 0, %s5, %s3
  $region1: #{measure_model_forward.3} parent=0
    #allocation2 [shape = 'u8[131072]{0}', space=vmem, size = 0x20000, scoped, tag = 'input window, operand 0, single buffered']
    #allocation3 [shape = 'u8[131072]{0}', space=vmem, size = 0x20000, scoped, tag = 'input window, operand 1, single buffered']
    // Predicated region
    $region2: #{measure_model_forward.3} parent=1 // pred_check
      _
    $region3: #{measure_model_forward.3} parent=1 // pred_check_branch
      %8 = sbr.rel (0) target = $region5
    $region4: #{measure_model_forward.3} parent=1 // pred_region
      // Predicated region
      $region6: #{measure_model_forward.3} parent=4 // pred_check
        _
      $region7: #{measure_model_forward.3} parent=4 // pred_check_branch
        %10 = sbr.rel (0) target = $region9
      $region8: #{measure_model_forward.3} parent=4 // pred_region
        // Predicated region
        $region10: #{measure_model_forward.3} parent=8 // pred_check
          _
        $region11: #{measure_model_forward.3} parent=8 // pred_check_branch
          %12 = sbr.rel (0) target = $region13
        $region12: #{measure_model_forward.3} parent=8 // pred_region
          loop: start=0, step=1, limit=1
          $region14: #{measure_model_forward.3} parent=12 // loop_pre_header
            _
          $region15: #{measure_model_forward.3} parent=12 // loop_header
            %s14 = sphi 0, %s18
            %p15 = scmp.ge.s32.totalorder %s14, 1
            %s19 = sphi %s0, %s0
            %s20 = sphi [#allocation2], [#allocation2]
          $region16: #{measure_model_forward.3} parent=12 // loop_header_branch
            %17 = sbr.rel (%p15) target = $region20
          $region17: #{measure_model_forward.3} parent=12 // loop_body
            %v21 = vld [vmem:[%s19] sm:$0xff]
            %22 = vst [vmem:[%s20] sm:$0xff] %v21
            %v23 = vld [vmem:[%s19 + $0x8] sm:$0xff]
            %24 = vst [vmem:[%s20 + $0x8] sm:$0xff] %v23
            %v25 = vld [vmem:[%s19 + $0x20] sm:$0xff]
            %26 = vst [vmem:[%s20 + $0x10] sm:$0xff] %v25
            %v27 = vld [vmem:[%s19 + $0x28] sm:$0xff]
            %28 = vst [vmem:[%s20 + $0x18] sm:$0xff] %v27
            %v29 = vld [vmem:[%s19 + $0x40] sm:$0xff]
            %30 = vst [vmem:[%s20 + $0x20] sm:$0xff] %v29
            %v31 = vld [vmem:[%s19 + $0x48] sm:$0xff]
            %32 = vst [vmem:[%s20 + $0x28] sm:$0xff] %v31
            %v33 = vld [vmem:[%s19 + $0x60] sm:$0xff]
            %34 = vst [vmem:[%s20 + $0x30] sm:$0xff] %v33
            %v35 = vld [vmem:[%s19 + $0x68] sm:$0xff]
            %36 = vst [vmem:[%s20 + $0x38] sm:$0xff] %v35
            %v37 = vld [vmem:[%s19 + $0x80] sm:$0xff]
            %38 = vst [vmem:[%s20 + $0x40] sm:$0xff] %v37
            %v39 = vld [vmem:[%s19 + $0x88] sm:$0xff]
            %40 = vst [vmem:[%s20 + $0x48] sm:$0xff] %v39
            %v41 = vld [vmem:[%s19 + $0xa0] sm:$0xff]
            %42 = vst [vmem:[%s20 + $0x50] sm:$0xff] %v41
            %v43 = vld [vmem:[%s19 + $0xa8] sm:$0xff]
            %44 = vst [vmem:[%s20 + $0x58] sm:$0xff] %v43
            %v45 = vld [vmem:[%s19 + $0xc0] sm:$0xff]
            %46 = vst [vmem:[%s20 + $0x60] sm:$0xff] %v45
            %v47 = vld [vmem:[%s19 + $0xc8] sm:$0xff]
            %48 = vst [vmem:[%s20 + $0x68] sm:$0xff] %v47
            %v49 = vld [vmem:[%s19 + $0xe0] sm:$0xff]
            %50 = vst [vmem:[%s20 + $0x70] sm:$0xff] %v49
            %v51 = vld [vmem:[%s19 + $0xe8] sm:$0xff]
            %52 = vst [vmem:[%s20 + $0x78] sm:$0xff] %v51
            %v53 = vld [vmem:[%s19 + $0x100] sm:$0xff]
            %54 = vst [vmem:[%s20 + $0x80] sm:$0xff] %v53
            %v55 = vld [vmem:[%s19 + $0x108] sm:$0xff]
            %56 = vst [vmem:[%s20 + $0x88] sm:$0xff] %v55
            %v57 = vld [vmem:[%s19 + $0x120] sm:$0xff]
            %58 = vst [vmem:[%s20 + $0x90] sm:$0xff] %v57
            %v59 = vld [vmem:[%s19 + $0x128] sm:$0xff]
            %60 = vst [vmem:[%s20 + $0x98] sm:$0xff] %v59
            %v61 = vld [vmem:[%s19 + $0x140] sm:$0xff]
            %62 = vst [vmem:[%s20 + $0xa0] sm:$0xff] %v61
            %v63 = vld [vmem:[%s19 + $0x148] sm:$0xff]
            %64 = vst [vmem:[%s20 + $0xa8] sm:$0xff] %v63
            %v65 = vld [vmem:[%s19 + $0x160] sm:$0xff]
            %66 = vst [vmem:[%s20 + $0xb0] sm:$0xff] %v65
            %v67 = vld [vmem:[%s19 + $0x168] sm:$0xff]
            %68 = vst [vmem:[%s20 + $0xb8] sm:$0xff] %v67
            %v69 = vld [vmem:[%s19 + $0x180] sm:$0xff]
            %70 = vst [vmem:[%s20 + $0xc0] sm:$0xff] %v69
            %v71 = vld [vmem:[%s19 + $0x188] sm:$0xff]
            %72 = vst [vmem:[%s20 + $0xc8] sm:$0xff] %v71
            %v73 = vld [vmem:[%s19 + $0x1a0] sm:$0xff]
            %74 = vst [vmem:[%s20 + $0xd0] sm:$0xff] %v73
            %v75 = vld [vmem:[%s19 + $0x1a8] sm:$0xff]
            %76 = vst [vmem:[%s20 + $0xd8] sm:$0xff] %v75
            %v77 = vld [vmem:[%s19 + $0x1c0] sm:$0xff]
            %78 = vst [vmem:[%s20 + $0xe0] sm:$0xff] %v77
            %v79 = vld [vmem:[%s19 + $0x1c8] sm:$0xff]
            %80 = vst [vmem:[%s20 + $0xe8] sm:$0xff] %v79
            %v81 = vld [vmem:[%s19 + $0x1e0] sm:$0xff]
            %82 = vst [vmem:[%s20 + $0xf0] sm:$0xff] %v81
            %v83 = vld [vmem:[%s19 + $0x1e8] sm:$0xff]
            %84 = vst [vmem:[%s20 + $0xf8] sm:$0xff] %v83
          $region18: #{measure_model_forward.3} parent=12 // loop_footer
            %s18 = sadd.s32 1, %s14
          $region19: #{measure_model_forward.3} parent=12 // loop_footer_branch
            %13 = sbr.rel target = $region15
          $region20: #{measure_model_forward.3} parent=12 // loop_exit
            _
        $region13: #{measure_model_forward.3} parent=8 // pred_fallthru
          _
        // Predicated region
        $region21: #{measure_model_forward.3} parent=8 // pred_check
          _
        $region22: #{measure_model_forward.3} parent=8 // pred_check_branch
          %86 = sbr.rel target = $region24
        $region23: #{measure_model_forward.3} parent=8 // pred_region
          _
        $region24: #{measure_model_forward.3} parent=8 // pred_fallthru
          _
      $region9: #{measure_model_forward.3} parent=4 // pred_fallthru
        _
      %87 = vnop
    $region5: #{measure_model_forward.3} parent=1 // pred_fallthru
      _
    // Predicated region
    $region25: #{measure_model_forward.3} parent=1 // pred_check
      _
    $region26: #{measure_model_forward.3} parent=1 // pred_check_branch
      %89 = sbr.rel (0) target = $region28
    $region27: #{measure_model_forward.3} parent=1 // pred_region
      %s90 = scalar_lea.vmem %s1, 16
      // Predicated region
      $region29: #{measure_model_forward.3} parent=27 // pred_check
        _
      $region30: #{measure_model_forward.3} parent=27 // pred_check_branch
        %92 = sbr.rel (0) target = $region32
      $region31: #{measure_model_forward.3} parent=27 // pred_region
        // Predicated region
        $region33: #{measure_model_forward.3} parent=31 // pred_check
          _
        $region34: #{measure_model_forward.3} parent=31 // pred_check_branch
          %94 = sbr.rel (0) target = $region36
        $region35: #{measure_model_forward.3} parent=31 // pred_region
          loop: start=0, step=1, limit=1
          $region37: #{measure_model_forward.3} parent=35 // loop_pre_header
            _
          $region38: #{measure_model_forward.3} parent=35 // loop_header
            %s96 = sphi 0, %s100
            %p97 = scmp.ge.s32.totalorder %s96, 1
            %s101 = sphi %s90, %s90
            %s102 = sphi [#allocation3], [#allocation3]
          $region39: #{measure_model_forward.3} parent=35 // loop_header_branch
            %99 = sbr.rel (%p97) target = $region43
          $region40: #{measure_model_forward.3} parent=35 // loop_body
            %v103 = vld [vmem:[%s101] sm:$0xff]
            %104 = vst [vmem:[%s102] sm:$0xff] %v103
            %v105 = vld [vmem:[%s101 + $0x8] sm:$0xff]
            %106 = vst [vmem:[%s102 + $0x8] sm:$0xff] %v105
            %v107 = vld [vmem:[%s101 + $0x20] sm:$0xff]
            %108 = vst [vmem:[%s102 + $0x10] sm:$0xff] %v107
            %v109 = vld [vmem:[%s101 + $0x28] sm:$0xff]
            %110 = vst [vmem:[%s102 + $0x18] sm:$0xff] %v109
            %v111 = vld [vmem:[%s101 + $0x40] sm:$0xff]
            %112 = vst [vmem:[%s102 + $0x20] sm:$0xff] %v111
            %v113 = vld [vmem:[%s101 + $0x48] sm:$0xff]
            %114 = vst [vmem:[%s102 + $0x28] sm:$0xff] %v113
            %v115 = vld [vmem:[%s101 + $0x60] sm:$0xff]
            %116 = vst [vmem:[%s102 + $0x30] sm:$0xff] %v115
            %v117 = vld [vmem:[%s101 + $0x68] sm:$0xff]
            %118 = vst [vmem:[%s102 + $0x38] sm:$0xff] %v117
            %v119 = vld [vmem:[%s101 + $0x80] sm:$0xff]
            %120 = vst [vmem:[%s102 + $0x40] sm:$0xff] %v119
            %v121 = vld [vmem:[%s101 + $0x88] sm:$0xff]
            %122 = vst [vmem:[%s102 + $0x48] sm:$0xff] %v121
            %v123 = vld [vmem:[%s101 + $0xa0] sm:$0xff]
            %124 = vst [vmem:[%s102 + $0x50] sm:$0xff] %v123
            %v125 = vld [vmem:[%s101 + $0xa8] sm:$0xff]
            %126 = vst [vmem:[%s102 + $0x58] sm:$0xff] %v125
            %v127 = vld [vmem:[%s101 + $0xc0] sm:$0xff]
            %128 = vst [vmem:[%s102 + $0x60] sm:$0xff] %v127
            %v129 = vld [vmem:[%s101 + $0xc8] sm:$0xff]
            %130 = vst [vmem:[%s102 + $0x68] sm:$0xff] %v129
            %v131 = vld [vmem:[%s101 + $0xe0] sm:$0xff]
            %132 = vst [vmem:[%s102 + $0x70] sm:$0xff] %v131
            %v133 = vld [vmem:[%s101 + $0xe8] sm:$0xff]
            %134 = vst [vmem:[%s102 + $0x78] sm:$0xff] %v133
            %v135 = vld [vmem:[%s101 + $0x100] sm:$0xff]
            %136 = vst [vmem:[%s102 + $0x80] sm:$0xff] %v135
            %v137 = vld [vmem:[%s101 + $0x108] sm:$0xff]
            %138 = vst [vmem:[%s102 + $0x88] sm:$0xff] %v137
            %v139 = vld [vmem:[%s101 + $0x120] sm:$0xff]
            %140 = vst [vmem:[%s102 + $0x90] sm:$0xff] %v139
            %v141 = vld [vmem:[%s101 + $0x128] sm:$0xff]
            %142 = vst [vmem:[%s102 + $0x98] sm:$0xff] %v141
            %v143 = vld [vmem:[%s101 + $0x140] sm:$0xff]
            %144 = vst [vmem:[%s102 + $0xa0] sm:$0xff] %v143
            %v145 = vld [vmem:[%s101 + $0x148] sm:$0xff]
            %146 = vst [vmem:[%s102 + $0xa8] sm:$0xff] %v145
            %v147 = vld [vmem:[%s101 + $0x160] sm:$0xff]
            %148 = vst [vmem:[%s102 + $0xb0] sm:$0xff] %v147
            %v149 = vld [vmem:[%s101 + $0x168] sm:$0xff]
            %150 = vst [vmem:[%s102 + $0xb8] sm:$0xff] %v149
            %v151 = vld [vmem:[%s101 + $0x180] sm:$0xff]
            %152 = vst [vmem:[%s102 + $0xc0] sm:$0xff] %v151
            %v153 = vld [vmem:[%s101 + $0x188] sm:$0xff]
            %154 = vst [vmem:[%s102 + $0xc8] sm:$0xff] %v153
            %v155 = vld [vmem:[%s101 + $0x1a0] sm:$0xff]
            %156 = vst [vmem:[%s102 + $0xd0] sm:$0xff] %v155
            %v157 = vld [vmem:[%s101 + $0x1a8] sm:$0xff]
            %158 = vst [vmem:[%s102 + $0xd8] sm:$0xff] %v157
            %v159 = vld [vmem:[%s101 + $0x1c0] sm:$0xff]
            %160 = vst [vmem:[%s102 + $0xe0] sm:$0xff] %v159
            %v161 = vld [vmem:[%s101 + $0x1c8] sm:$0xff]
            %162 = vst [vmem:[%s102 + $0xe8] sm:$0xff] %v161
            %v163 = vld [vmem:[%s101 + $0x1e0] sm:$0xff]
            %164 = vst [vmem:[%s102 + $0xf0] sm:$0xff] %v163
            %v165 = vld [vmem:[%s101 + $0x1e8] sm:$0xff]
            %166 = vst [vmem:[%s102 + $0xf8] sm:$0xff] %v165
          $region41: #{measure_model_forward.3} parent=35 // loop_footer
            %s100 = sadd.s32 1, %s96
          $region42: #{measure_model_forward.3} parent=35 // loop_footer_branch
            %95 = sbr.rel target = $region38
          $region43: #{measure_model_forward.3} parent=35 // loop_exit
            _
        $region36: #{measure_model_forward.3} parent=31 // pred_fallthru
          _
        // Predicated region
        $region44: #{measure_model_forward.3} parent=31 // pred_check
          _
        $region45: #{measure_model_forward.3} parent=31 // pred_check_branch
          %168 = sbr.rel target = $region47
        $region46: #{measure_model_forward.3} parent=31 // pred_region
          _
        $region47: #{measure_model_forward.3} parent=31 // pred_fallthru
          _
      $region32: #{measure_model_forward.3} parent=27 // pred_fallthru
        _
      %169 = vnop
    $region28: #{measure_model_forward.3} parent=1 // pred_fallthru
      _
    // Predicated region
    $region48: #{measure_model_forward.3} parent=1 // pred_check
      _
    $region49: #{measure_model_forward.3} parent=1 // pred_check_branch
      %171 = sbr.rel (0) target = $region51
    $region50: #{measure_model_forward.3} parent=1 // pred_region
      _
    $region51: #{measure_model_forward.3} parent=1 // pred_fallthru
      _
    // Predicated region
    $region52: #{measure_model_forward.3} parent=1 // pred_check
      _
    $region53: #{measure_model_forward.3} parent=1 // pred_check_branch
      %173 = sbr.rel (0) target = $region55
    $region54: #{measure_model_forward.3} parent=1 // pred_region
      _
    $region55: #{measure_model_forward.3} parent=1 // pred_fallthru
      _
    %v174 = vld [vmem:[#allocation2] sm:$0xff]
    %v175 = vld [vmem:[#allocation2 + $0x8] sm:$0xff]
    %v176 = vld [vmem:[#allocation2 + $0x10] sm:$0xff]
    %v177 = vld [vmem:[#allocation2 + $0x18] sm:$0xff]
    %v178 = vld [vmem:[#allocation2 + $0x20] sm:$0xff]
    %v179 = vld [vmem:[#allocation2 + $0x28] sm:$0xff]
    %v180 = vld [vmem:[#allocation2 + $0x30] sm:$0xff]
    %v181 = vld [vmem:[#allocation2 + $0x38] sm:$0xff]
    %v182 = vld [vmem:[#allocation2 + $0x40] sm:$0xff]
    %v183 = vld [vmem:[#allocation2 + $0x48] sm:$0xff]
    %v184 = vld [vmem:[#allocation2 + $0x50] sm:$0xff]
    %v185 = vld [vmem:[#allocation2 + $0x58] sm:$0xff]
    %v186 = vld [vmem:[#allocation2 + $0x60] sm:$0xff]
    %v187 = vld [vmem:[#allocation2 + $0x68] sm:$0xff]
    %v188 = vld [vmem:[#allocation2 + $0x70] sm:$0xff]
    %v189 = vld [vmem:[#allocation2 + $0x78] sm:$0xff]
    %v190 = vld [vmem:[#allocation2 + $0x80] sm:$0xff]
    %v191 = vld [vmem:[#allocation2 + $0x88] sm:$0xff]
    %v192 = vld [vmem:[#allocation2 + $0x90] sm:$0xff]
    %v193 = vld [vmem:[#allocation2 + $0x98] sm:$0xff]
    %v194 = vld [vmem:[#allocation2 + $0xa0] sm:$0xff]
    %v195 = vld [vmem:[#allocation2 + $0xa8] sm:$0xff]
    %v196 = vld [vmem:[#allocation2 + $0xb0] sm:$0xff]
    %v197 = vld [vmem:[#allocation2 + $0xb8] sm:$0xff]
    %v198 = vld [vmem:[#allocation2 + $0xc0] sm:$0xff]
    %v199 = vld [vmem:[#allocation2 + $0xc8] sm:$0xff]
    %v200 = vld [vmem:[#allocation2 + $0xd0] sm:$0xff]
    %v201 = vld [vmem:[#allocation2 + $0xd8] sm:$0xff]
    %v202 = vld [vmem:[#allocation2 + $0xe0] sm:$0xff]
    %v203 = vld [vmem:[#allocation2 + $0xe8] sm:$0xff]
    %v204 = vld [vmem:[#allocation2 + $0xf0] sm:$0xff]
    %v205 = vld [vmem:[#allocation2 + $0xf8] sm:$0xff]
    %v206 = vld [vmem:[#allocation3] sm:$0xff]
    %v207 = vld [vmem:[#allocation3 + $0x8] sm:$0xff]
    %v208 = vld [vmem:[#allocation3 + $0x10] sm:$0xff]
    %v209 = vld [vmem:[#allocation3 + $0x18] sm:$0xff]
    %v210 = vld [vmem:[#allocation3 + $0x20] sm:$0xff]
    %v211 = vld [vmem:[#allocation3 + $0x28] sm:$0xff]
    %v212 = vld [vmem:[#allocation3 + $0x30] sm:$0xff]
    %v213 = vld [vmem:[#allocation3 + $0x38] sm:$0xff]
    %v214 = vld [vmem:[#allocation3 + $0x40] sm:$0xff]
    %v215 = vld [vmem:[#allocation3 + $0x48] sm:$0xff]
    %v216 = vld [vmem:[#allocation3 + $0x50] sm:$0xff]
    %v217 = vld [vmem:[#allocation3 + $0x58] sm:$0xff]
    %v218 = vld [vmem:[#allocation3 + $0x60] sm:$0xff]
    %v219 = vld [vmem:[#allocation3 + $0x68] sm:$0xff]
    %v220 = vld [vmem:[#allocation3 + $0x70] sm:$0xff]
    %v221 = vld [vmem:[#allocation3 + $0x78] sm:$0xff]
    %v222 = vld [vmem:[#allocation3 + $0x80] sm:$0xff]
    %v223 = vld [vmem:[#allocation3 + $0x88] sm:$0xff]
    %v224 = vld [vmem:[#allocation3 + $0x90] sm:$0xff]
    %v225 = vld [vmem:[#allocation3 + $0x98] sm:$0xff]
    %v226 = vld [vmem:[#allocation3 + $0xa0] sm:$0xff]
    %v227 = vld [vmem:[#allocation3 + $0xa8] sm:$0xff]
    %v228 = vld [vmem:[#allocation3 + $0xb0] sm:$0xff]
    %v229 = vld [vmem:[#allocation3 + $0xb8] sm:$0xff]
    %v230 = vld [vmem:[#allocation3 + $0xc0] sm:$0xff]
    %v231 = vld [vmem:[#allocation3 + $0xc8] sm:$0xff]
    %v232 = vld [vmem:[#allocation3 + $0xd0] sm:$0xff]
    %v233 = vld [vmem:[#allocation3 + $0xd8] sm:$0xff]
    %v234 = vld [vmem:[#allocation3 + $0xe0] sm:$0xff]
    %v235 = vld [vmem:[#allocation3 + $0xe8] sm:$0xff]
    %v236 = vld [vmem:[#allocation3 + $0xf0] sm:$0xff]
    %v237 = vld [vmem:[#allocation3 + $0xf8] sm:$0xff]
    %238 = vmatpush.xpose.msra.mxu0 %v236
    %239 = vmatpush.xpose.msra.mxu0 %v234
    %240 = vmatpush.xpose.msra.mxu0 %v232
    %241 = vmatpush.xpose.msra.mxu0 %v230
    %242 = vmatpush.xpose.msra.mxu0 %v228
    %243 = vmatpush.xpose.msra.mxu0 %v226
    %244 = vmatpush.xpose.msra.mxu0 %v224
    %245 = vmatpush.xpose.msra.mxu0 %v222
    %246 = vmatpush.xpose.msra.mxu0 %v220
    %247 = vmatpush.xpose.msra.mxu0 %v218
    %248 = vmatpush.xpose.msra.mxu0 %v216
    %249 = vmatpush.xpose.msra.mxu0 %v214
    %250 = vmatpush.xpose.msra.mxu0 %v212
    %251 = vmatpush.xpose.msra.mxu0 %v210
    %252 = vmatpush.xpose.msra.mxu0 %v208
    %253 = vmatpush.xpose.msra.mxu0 %v206
    %254 = vmatmul.f32.gmra.mxu0 %v174
    %v255 = vpop.f32.mrf.mxu0
    %v256 = vadd.f32 0.0, %v255
    %257 = vmatmul.f32.gmra.mxu0 %v176
    %v258 = vpop.f32.mrf.mxu0
    %v259 = vadd.f32 0.0, %v258
    %260 = vmatmul.f32.gmra.mxu0 %v178
    %v261 = vpop.f32.mrf.mxu0
    %v262 = vadd.f32 0.0, %v261
    %263 = vmatmul.f32.gmra.mxu0 %v180
    %v264 = vpop.f32.mrf.mxu0
    %v265 = vadd.f32 0.0, %v264
    %266 = vmatmul.f32.gmra.mxu0 %v182
    %v267 = vpop.f32.mrf.mxu0
    %v268 = vadd.f32 0.0, %v267
    %269 = vmatmul.f32.gmra.mxu0 %v184
    %v270 = vpop.f32.mrf.mxu0
    %v271 = vadd.f32 0.0, %v270
    %272 = vmatmul.f32.gmra.mxu0 %v186
    %v273 = vpop.f32.mrf.mxu0
    %v274 = vadd.f32 0.0, %v273
    %275 = vmatmul.f32.gmra.mxu0 %v188
    %v276 = vpop.f32.mrf.mxu0
    %v277 = vadd.f32 0.0, %v276
    %278 = vmatmul.f32.gmra.mxu0 %v190
    %v279 = vpop.f32.mrf.mxu0
    %v280 = vadd.f32 0.0, %v279
    %281 = vmatmul.f32.gmra.mxu0 %v192
    %v282 = vpop.f32.mrf.mxu0
    %v283 = vadd.f32 0.0, %v282
    %284 = vmatmul.f32.gmra.mxu0 %v194
    %v285 = vpop.f32.mrf.mxu0
    %v286 = vadd.f32 0.0, %v285
    %287 = vmatmul.f32.gmra.mxu0 %v196
    %v288 = vpop.f32.mrf.mxu0
    %v289 = vadd.f32 0.0, %v288
    %290 = vmatmul.f32.gmra.mxu0 %v198
    %v291 = vpop.f32.mrf.mxu0
    %v292 = vadd.f32 0.0, %v291
    %293 = vmatmul.f32.gmra.mxu0 %v200
    %v294 = vpop.f32.mrf.mxu0
    %v295 = vadd.f32 0.0, %v294
    %296 = vmatmul.f32.gmra.mxu0 %v202
    %v297 = vpop.f32.mrf.mxu0
    %v298 = vadd.f32 0.0, %v297
    %299 = vmatmul.f32.gmra.mxu0 %v204
    %v300 = vpop.f32.mrf.mxu0
    %v301 = vadd.f32 0.0, %v300
    %302 = vdwg.mxu0
    %303 = vmatpush.xpose.msra.mxu0 %v237
    %304 = vmatpush.xpose.msra.mxu0 %v235
    %305 = vmatpush.xpose.msra.mxu0 %v233
    %306 = vmatpush.xpose.msra.mxu0 %v231
    %307 = vmatpush.xpose.msra.mxu0 %v229
    %308 = vmatpush.xpose.msra.mxu0 %v227
    %309 = vmatpush.xpose.msra.mxu0 %v225
    %310 = vmatpush.xpose.msra.mxu0 %v223
    %311 = vmatpush.xpose.msra.mxu0 %v221
    %312 = vmatpush.xpose.msra.mxu0 %v219
    %313 = vmatpush.xpose.msra.mxu0 %v217
    %314 = vmatpush.xpose.msra.mxu0 %v215
    %315 = vmatpush.xpose.msra.mxu0 %v213
    %316 = vmatpush.xpose.msra.mxu0 %v211
    %317 = vmatpush.xpose.msra.mxu0 %v209
    %318 = vmatpush.xpose.msra.mxu0 %v207
    %319 = vmatmul.f32.gmra.mxu0 %v175
    %v320 = vpop.f32.mrf.mxu0
    %v321 = vadd.f32 %v256, %v320
    %322 = vmatmul.f32.gmra.mxu0 %v177
    %v323 = vpop.f32.mrf.mxu0
    %v324 = vadd.f32 %v259, %v323
    %325 = vmatmul.f32.gmra.mxu0 %v179
    %v326 = vpop.f32.mrf.mxu0
    %v327 = vadd.f32 %v262, %v326
    %328 = vmatmul.f32.gmra.mxu0 %v181
    %v329 = vpop.f32.mrf.mxu0
    %v330 = vadd.f32 %v265, %v329
    %331 = vmatmul.f32.gmra.mxu0 %v183
    %v332 = vpop.f32.mrf.mxu0
    %v333 = vadd.f32 %v268, %v332
    %334 = vmatmul.f32.gmra.mxu0 %v185
    %v335 = vpop.f32.mrf.mxu0
    %v336 = vadd.f32 %v271, %v335
    %337 = vmatmul.f32.gmra.mxu0 %v187
    %v338 = vpop.f32.mrf.mxu0
    %v339 = vadd.f32 %v274, %v338
    %340 = vmatmul.f32.gmra.mxu0 %v189
    %v341 = vpop.f32.mrf.mxu0
    %v342 = vadd.f32 %v277, %v341
    %343 = vmatmul.f32.gmra.mxu0 %v191
    %v344 = vpop.f32.mrf.mxu0
    %v345 = vadd.f32 %v280, %v344
    %346 = vmatmul.f32.gmra.mxu0 %v193
    %v347 = vpop.f32.mrf.mxu0
    %v348 = vadd.f32 %v283, %v347
    %349 = vmatmul.f32.gmra.mxu0 %v195
    %v350 = vpop.f32.mrf.mxu0
    %v351 = vadd.f32 %v286, %v350
    %352 = vmatmul.f32.gmra.mxu0 %v197
    %v353 = vpop.f32.mrf.mxu0
    %v354 = vadd.f32 %v289, %v353
    %355 = vmatmul.f32.gmra.mxu0 %v199
    %v356 = vpop.f32.mrf.mxu0
    %v357 = vadd.f32 %v292, %v356
    %358 = vmatmul.f32.gmra.mxu0 %v201
    %v359 = vpop.f32.mrf.mxu0
    %v360 = vadd.f32 %v295, %v359
    %361 = vmatmul.f32.gmra.mxu0 %v203
    %v362 = vpop.f32.mrf.mxu0
    %v363 = vadd.f32 %v298, %v362
    %364 = vmatmul.f32.gmra.mxu0 %v205
    %v365 = vpop.f32.mrf.mxu0
    %v366 = vadd.f32 %v301, %v365
    %367 = vdwg.mxu0
    %v368 = vmul.f32 %v321, 0.5
    %v369 = vmul.f32 %v324, 0.5
    %v370 = vmul.f32 %v327, 0.5
    %v371 = vmul.f32 %v330, 0.5
    %v372 = vmul.f32 %v333, 0.5
    %v373 = vmul.f32 %v336, 0.5
    %v374 = vmul.f32 %v339, 0.5
    %v375 = vmul.f32 %v342, 0.5
    %v376 = vmul.f32 %v345, 0.5
    %v377 = vmul.f32 %v348, 0.5
    %v378 = vmul.f32 %v351, 0.5
    %v379 = vmul.f32 %v354, 0.5
    %v380 = vmul.f32 %v357, 0.5
    %v381 = vmul.f32 %v360, 0.5
    %v382 = vmul.f32 %v363, 0.5
    %v383 = vmul.f32 %v366, 0.5
    %v384 = vtanh.pop %v368
    %v385 = vtanh.pop %v369
    %v386 = vtanh.pop %v370
    %v387 = vtanh.pop %v371
    %v388 = vtanh.pop %v372
    %v389 = vtanh.pop %v373
    %v390 = vtanh.pop %v374
    %v391 = vtanh.pop %v375
    %v392 = vtanh.pop %v376
    %v393 = vtanh.pop %v377
    %v394 = vtanh.pop %v378
    %v395 = vtanh.pop %v379
    %v396 = vtanh.pop %v380
    %v397 = vtanh.pop %v381
    %v398 = vtanh.pop %v382
    %v399 = vtanh.pop %v383
    %v400 = vmul.f32 %v384, 0.5
    %v401 = vmul.f32 %v385, 0.5
    %v402 = vmul.f32 %v386, 0.5
    %v403 = vmul.f32 %v387, 0.5
    %v404 = vmul.f32 %v388, 0.5
    %v405 = vmul.f32 %v389, 0.5
    %v406 = vmul.f32 %v390, 0.5
    %v407 = vmul.f32 %v391, 0.5
    %v408 = vmul.f32 %v392, 0.5
    %v409 = vmul.f32 %v393, 0.5
    %v410 = vmul.f32 %v394, 0.5
    %v411 = vmul.f32 %v395, 0.5
    %v412 = vmul.f32 %v396, 0.5
    %v413 = vmul.f32 %v397, 0.5
    %v414 = vmul.f32 %v398, 0.5
    %v415 = vmul.f32 %v399, 0.5
    %v416 = vadd.f32 %v400, 0.5
    %v417 = vadd.f32 %v401, 0.5
    %v418 = vadd.f32 %v402, 0.5
    %v419 = vadd.f32 %v403, 0.5
    %v420 = vadd.f32 %v404, 0.5
    %v421 = vadd.f32 %v405, 0.5
    %v422 = vadd.f32 %v406, 0.5
    %v423 = vadd.f32 %v407, 0.5
    %v424 = vadd.f32 %v408, 0.5
    %v425 = vadd.f32 %v409, 0.5
    %v426 = vadd.f32 %v410, 0.5
    %v427 = vadd.f32 %v411, 0.5
    %v428 = vadd.f32 %v412, 0.5
    %v429 = vadd.f32 %v413, 0.5
    %v430 = vadd.f32 %v414, 0.5
    %v431 = vadd.f32 %v415, 0.5
    %432 = vst [vmem:[%s2] sm:$0xff] %v416
    %433 = vst [vmem:[%s2 + $0x8] sm:$0xff] %v417
    %434 = vst [vmem:[%s2 + $0x10] sm:$0xff] %v418
    %435 = vst [vmem:[%s2 + $0x18] sm:$0xff] %v419
    %436 = vst [vmem:[%s2 + $0x20] sm:$0xff] %v420
    %437 = vst [vmem:[%s2 + $0x28] sm:$0xff] %v421
    %438 = vst [vmem:[%s2 + $0x30] sm:$0xff] %v422
    %439 = vst [vmem:[%s2 + $0x38] sm:$0xff] %v423
    %440 = vst [vmem:[%s2 + $0x40] sm:$0xff] %v424
    %441 = vst [vmem:[%s2 + $0x48] sm:$0xff] %v425
    %442 = vst [vmem:[%s2 + $0x50] sm:$0xff] %v426
    %443 = vst [vmem:[%s2 + $0x58] sm:$0xff] %v427
    %444 = vst [vmem:[%s2 + $0x60] sm:$0xff] %v428
    %445 = vst [vmem:[%s2 + $0x68] sm:$0xff] %v429
    %446 = vst [vmem:[%s2 + $0x70] sm:$0xff] %v430
    %447 = vst [vmem:[%s2 + $0x78] sm:$0xff] %v431
    // Predicated region
    $region56: #{measure_model_forward.3} parent=1 // pred_check
      _
    $region57: #{measure_model_forward.3} parent=1 // pred_check_branch
      %449 = sbr.rel (0) target = $region59
    $region58: #{measure_model_forward.3} parent=1 // pred_region
      _
    $region59: #{measure_model_forward.3} parent=1 // pred_fallthru
      _
    // Predicated region
    $region60: #{measure_model_forward.3} parent=1 // pred_check
      _
    $region61: #{measure_model_forward.3} parent=1 // pred_check_branch
      %451 = sbr.rel (0) target = $region63
    $region62: #{measure_model_forward.3} parent=1 // pred_region
      _
    $region63: #{measure_model_forward.3} parent=1 // pred_fallthru
      _

// kernel: measure_model_forward.2
$region0: #{measure_model_forward.2}
  #allocation0 [shape = 'u32[]', space=smem, size = 0x4, offset = 0x4, fixed_abs, tag = 'smem constant byte address 0x4 - core index']
  #allocation1 [shape = 'u32[72,128]{1,0:T(1,128)}', space=vmem, size = 0x9000, scoped, tag = 'internal scratch']
  %s0 = inlined_call_operand.vmem [shape: f32[128,32], index: 0, kind: input, shape index: {}]
  %s1 = inlined_call_operand.vmem [shape: f32[32,512], index: 1, kind: input, shape index: {}]
  %s2 = inlined_call_operand.vmem [shape: f32[1,512], index: 2, kind: input, shape index: {}]
  %s3 = inlined_call_operand.vmem [shape: f32[128,512], index: 3, kind: output, shape index: {}]
  %s4 = sld [smem:[#allocation0]]
  $region22: #{measure_model_forward.2} parent=0
    _
  %s6 = ssub.s32 1, %s4
  %s7 = scalar_select 0, %s6, %s4
  // Predicated region
  $region2: #{measure_model_forward.2} parent=0 // pred_check
    _
  $region3: #{measure_model_forward.2} parent=0 // pred_check_branch
    %9 = sbr.rel (0) target = $region5
  $region4: #{measure_model_forward.2} parent=0 // pred_region
    _
  $region5: #{measure_model_forward.2} parent=0 // pred_fallthru
    _
  // Predicated region
  $region6: #{measure_model_forward.2} parent=0 // pred_check
    _
  $region7: #{measure_model_forward.2} parent=0 // pred_check_branch
    %11 = sbr.rel (0) target = $region9
  $region8: #{measure_model_forward.2} parent=0 // pred_region
    _
  $region9: #{measure_model_forward.2} parent=0 // pred_fallthru
    _
  // Predicated region
  $region10: #{measure_model_forward.2} parent=0 // pred_check
    _
  $region11: #{measure_model_forward.2} parent=0 // pred_check_branch
    %13 = sbr.rel (0) target = $region13
  $region12: #{measure_model_forward.2} parent=0 // pred_region
    _
  $region13: #{measure_model_forward.2} parent=0 // pred_fallthru
    _
  %v14 = vld [vmem:[%s0] sm:$0xff]
  %v15 = vld [vmem:[%s0 + $0x8] sm:$0xff]
  %v16 = vld [vmem:[%s0 + $0x10] sm:$0xff]
  %v17 = vld [vmem:[%s0 + $0x18] sm:$0xff]
  %v18 = vld [vmem:[%s0 + $0x20] sm:$0xff]
  %v19 = vld [vmem:[%s0 + $0x28] sm:$0xff]
  %v20 = vld [vmem:[%s0 + $0x30] sm:$0xff]
  %v21 = vld [vmem:[%s0 + $0x38] sm:$0xff]
  %v22 = vld [vmem:[%s0 + $0x40] sm:$0xff]
  %v23 = vld [vmem:[%s0 + $0x48] sm:$0xff]
  %v24 = vld [vmem:[%s0 + $0x50] sm:$0xff]
  %v25 = vld [vmem:[%s0 + $0x58] sm:$0xff]
  %v26 = vld [vmem:[%s0 + $0x60] sm:$0xff]
  %v27 = vld [vmem:[%s0 + $0x68] sm:$0xff]
  %v28 = vld [vmem:[%s0 + $0x70] sm:$0xff]
  %v29 = vld [vmem:[%s0 + $0x78] sm:$0xff]
  %v30 = vld [vmem:[%s1] sm:$0xff]
  %v31 = vld [vmem:[%s1 + $0x8] sm:$0xff]
  %v32 = vld [vmem:[%s1 + $0x10] sm:$0xff]
  %v33 = vld [vmem:[%s1 + $0x18] sm:$0xff]
  %v34 = vld [vmem:[%s1 + $0x20] sm:$0xff]
  %v35 = vld [vmem:[%s1 + $0x28] sm:$0xff]
  %v36 = vld [vmem:[%s1 + $0x30] sm:$0xff]
  %v37 = vld [vmem:[%s1 + $0x38] sm:$0xff]
  %v38 = vld [vmem:[%s1 + $0x40] sm:$0xff]
  %v39 = vld [vmem:[%s1 + $0x48] sm:$0xff]
  %v40 = vld [vmem:[%s1 + $0x50] sm:$0xff]
  %v41 = vld [vmem:[%s1 + $0x58] sm:$0xff]
  %v42 = vld [vmem:[%s1 + $0x60] sm:$0xff]
  %v43 = vld [vmem:[%s1 + $0x68] sm:$0xff]
  %v44 = vld [vmem:[%s1 + $0x70] sm:$0xff]
  %v45 = vld [vmem:[%s1 + $0x78] sm:$0xff]
  %v46 = vld [vmem:[%s2] sm:$0xf]
  %v48 = vperm.slane %v46, 0
  %v49 = vperm.slane %v46, 1
  %v50 = vperm.slane %v46, 2
  %v51 = vperm.slane %v46, 3
  %vm56 = vcmask 261120
  %v58 = vsel %vm56, %v14, 0
  %v61 = vsel %vm56, %v15, 0
  %v64 = vsel %vm56, %v16, 0
  %v67 = vsel %vm56, %v17, 0
  %v70 = vsel %vm56, %v18, 0
  %v73 = vsel %vm56, %v19, 0
  %v76 = vsel %vm56, %v20, 0
  %v79 = vsel %vm56, %v21, 0
  %v82 = vsel %vm56, %v22, 0
  %v85 = vsel %vm56, %v23, 0
  %v88 = vsel %vm56, %v24, 0
  %v91 = vsel %vm56, %v25, 0
  %v94 = vsel %vm56, %v26, 0
  %v97 = vsel %vm56, %v27, 0
  %v100 = vsel %vm56, %v28, 0
  %v103 = vsel %vm56, %v29, 0
  %105 = vmatpush.msra.mxu0 0.0
  %106 = vmatpush.msra.mxu0 0.0
  %107 = vmatpush.msra.mxu0 0.0
  %108 = vmatpush.msra.mxu0 0.0
  %109 = vmatpush.msra.mxu0 0.0
  %110 = vmatpush.msra.mxu0 0.0
  %111 = vmatpush.msra.mxu0 0.0
  %112 = vmatpush.msra.mxu0 0.0
  %113 = vmatpush.msra.mxu0 0.0
  %114 = vmatpush.msra.mxu0 0.0
  %115 = vmatpush.msra.mxu0 0.0
  %116 = vmatpush.msra.mxu0 0.0
  %117 = vmatpush.msra.mxu0 %v42
  %118 = vmatpush.msra.mxu0 %v38
  %119 = vmatpush.msra.mxu0 %v34
  %120 = vmatpush.msra.mxu0 %v30
  %121 = vmatmul.f32.gmra.mxu0 %v58
  %v122 = vpop.f32.mrf.mxu0
  %v123 = vadd.f32 %v48, %v122
  %124 = vmatmul.f32.gmra.mxu0 %v61
  %v125 = vpop.f32.mrf.mxu0
  %v126 = vadd.f32 %v48, %v125
  %127 = vmatmul.f32.gmra.mxu0 %v64
  %v128 = vpop.f32.mrf.mxu0
  %v129 = vadd.f32 %v48, %v128
  %130 = vmatmul.f32.gmra.mxu0 %v67
  %v131 = vpop.f32.mrf.mxu0
  %v132 = vadd.f32 %v48, %v131
  %133 = vmatmul.f32.gmra.mxu0 %v70
  %v134 = vpop.f32.mrf.mxu0
  %v135 = vadd.f32 %v48, %v134
  %136 = vmatmul.f32.gmra.mxu0 %v73
  %v137 = vpop.f32.mrf.mxu0
  %v138 = vadd.f32 %v48, %v137
  %139 = vmatmul.f32.gmra.mxu0 %v76
  %v140 = vpop.f32.mrf.mxu0
  %v141 = vadd.f32 %v48, %v140
  %142 = vmatmul.f32.gmra.mxu0 %v79
  %v143 = vpop.f32.mrf.mxu0
  %v144 = vadd.f32 %v48, %v143
  %145 = vmatmul.f32.gmra.mxu0 %v82
  %v146 = vpop.f32.mrf.mxu0
  %v147 = vadd.f32 %v48, %v146
  %148 = vmatmul.f32.gmra.mxu0 %v85
  %v149 = vpop.f32.mrf.mxu0
  %v150 = vadd.f32 %v48, %v149
  %151 = vmatmul.f32.gmra.mxu0 %v88
  %v152 = vpop.f32.mrf.mxu0
  %v153 = vadd.f32 %v48, %v152
  %154 = vmatmul.f32.gmra.mxu0 %v91
  %v155 = vpop.f32.mrf.mxu0
  %v156 = vadd.f32 %v48, %v155
  %157 = vmatmul.f32.gmra.mxu0 %v94
  %v158 = vpop.f32.mrf.mxu0
  %v159 = vadd.f32 %v48, %v158
  %160 = vmatmul.f32.gmra.mxu0 %v97
  %v161 = vpop.f32.mrf.mxu0
  %v162 = vadd.f32 %v48, %v161
  %163 = vmatmul.f32.gmra.mxu0 %v100
  %v164 = vpop.f32.mrf.mxu0
  %v165 = vadd.f32 %v48, %v164
  %166 = vmatmul.f32.gmra.mxu0 %v103
  %v167 = vpop.f32.mrf.mxu0
  %v168 = vadd.f32 %v48, %v167
  %169 = vdwg.mxu0
  %170 = vmatpush.msra.mxu0 0.0
  %171 = vmatpush.msra.mxu0 0.0
  %172 = vmatpush.msra.mxu0 0.0
  %173 = vmatpush.msra.mxu0 0.0
  %174 = vmatpush.msra.mxu0 0.0
  %175 = vmatpush.msra.mxu0 0.0
  %176 = vmatpush.msra.mxu0 0.0
  %177 = vmatpush.msra.mxu0 0.0
  %178 = vmatpush.msra.mxu0 0.0
  %179 = vmatpush.msra.mxu0 0.0
  %180 = vmatpush.msra.mxu0 0.0
  %181 = vmatpush.msra.mxu0 0.0
  %182 = vmatpush.msra.mxu0 %v43
  %183 = vmatpush.msra.mxu0 %v39
  %184 = vmatpush.msra.mxu0 %v35
  %185 = vmatpush.msra.mxu0 %v31
  %186 = vmatmul.f32.gmra.mxu0 %v58
  %v187 = vpop.f32.mrf.mxu0
  %v188 = vadd.f32 %v49, %v187
  %189 = vmatmul.f32.gmra.mxu0 %v61
  %v190 = vpop.f32.mrf.mxu0
  %v191 = vadd.f32 %v49, %v190
  %192 = vmatmul.f32.gmra.mxu0 %v64
  %v193 = vpop.f32.mrf.mxu0
  %v194 = vadd.f32 %v49, %v193
  %195 = vmatmul.f32.gmra.mxu0 %v67
  %v196 = vpop.f32.mrf.mxu0
  %v197 = vadd.f32 %v49, %v196
  %198 = vmatmul.f32.gmra.mxu0 %v70
  %v199 = vpop.f32.mrf.mxu0
  %v200 = vadd.f32 %v49, %v199
  %201 = vmatmul.f32.gmra.mxu0 %v73
  %v202 = vpop.f32.mrf.mxu0
  %v203 = vadd.f32 %v49, %v202
  %204 = vmatmul.f32.gmra.mxu0 %v76
  %v205 = vpop.f32.mrf.mxu0
  %v206 = vadd.f32 %v49, %v205
  %207 = vmatmul.f32.gmra.mxu0 %v79
  %v208 = vpop.f32.mrf.mxu0
  %v209 = vadd.f32 %v49, %v208
  %210 = vmatmul.f32.gmra.mxu0 %v82
  %v211 = vpop.f32.mrf.mxu0
  %v212 = vadd.f32 %v49, %v211
  %213 = vmatmul.f32.gmra.mxu0 %v85
  %v214 = vpop.f32.mrf.mxu0
  %v215 = vadd.f32 %v49, %v214
  %216 = vmatmul.f32.gmra.mxu0 %v88
  %v217 = vpop.f32.mrf.mxu0
  %v218 = vadd.f32 %v49, %v217
  %219 = vmatmul.f32.gmra.mxu0 %v91
  %v220 = vpop.f32.mrf.mxu0
  %v221 = vadd.f32 %v49, %v220
  %222 = vmatmul.f32.gmra.mxu0 %v94
  %v223 = vpop.f32.mrf.mxu0
  %v224 = vadd.f32 %v49, %v223
  %225 = vmatmul.f32.gmra.mxu0 %v97
  %v226 = vpop.f32.mrf.mxu0
  %v227 = vadd.f32 %v49, %v226
  %228 = vmatmul.f32.gmra.mxu0 %v100
  %v229 = vpop.f32.mrf.mxu0
  %v230 = vadd.f32 %v49, %v229
  %231 = vmatmul.f32.gmra.mxu0 %v103
  %v232 = vpop.f32.mrf.mxu0
  %v233 = vadd.f32 %v49, %v232
  %234 = vdwg.mxu0
  %235 = vmatpush.msra.mxu0 0.0
  %236 = vmatpush.msra.mxu0 0.0
  %237 = vmatpush.msra.mxu0 0.0
  %238 = vmatpush.msra.mxu0 0.0
  %239 = vmatpush.msra.mxu0 0.0
  %240 = vmatpush.msra.mxu0 0.0
  %241 = vmatpush.msra.mxu0 0.0
  %242 = vmatpush.msra.mxu0 0.0
  %243 = vmatpush.msra.mxu0 0.0
  %244 = vmatpush.msra.mxu0 0.0
  %245 = vmatpush.msra.mxu0 0.0
  %246 = vmatpush.msra.mxu0 0.0
  %247 = vmatpush.msra.mxu0 %v44
  %248 = vmatpush.msra.mxu0 %v40
  %249 = vmatpush.msra.mxu0 %v36
  %250 = vmatpush.msra.mxu0 %v32
  %251 = vmatmul.f32.gmra.mxu0 %v58
  %v252 = vpop.f32.mrf.mxu0
  %v253 = vadd.f32 %v50, %v252
  %254 = vmatmul.f32.gmra.mxu0 %v61
  %v255 = vpop.f32.mrf.mxu0
  %v256 = vadd.f32 %v50, %v255
  %257 = vmatmul.f32.gmra.mxu0 %v64
  %v258 = vpop.f32.mrf.mxu0
  %v259 = vadd.f32 %v50, %v258
  %260 = vmatmul.f32.gmra.mxu0 %v67
  %v261 = vpop.f32.mrf.mxu0
  %v262 = vadd.f32 %v50, %v261
  %263 = vmatmul.f32.gmra.mxu0 %v70
  %v264 = vpop.f32.mrf.mxu0
  %v265 = vadd.f32 %v50, %v264
  %266 = vmatmul.f32.gmra.mxu0 %v73
  %v267 = vpop.f32.mrf.mxu0
  %v268 = vadd.f32 %v50, %v267
  %269 = vmatmul.f32.gmra.mxu0 %v76
  %v270 = vpop.f32.mrf.mxu0
  %v271 = vadd.f32 %v50, %v270
  %272 = vmatmul.f32.gmra.mxu0 %v79
  %v273 = vpop.f32.mrf.mxu0
  %v274 = vadd.f32 %v50, %v273
  %275 = vmatmul.f32.gmra.mxu0 %v82
  %v276 = vpop.f32.mrf.mxu0
  %v277 = vadd.f32 %v50, %v276
  %278 = vmatmul.f32.gmra.mxu0 %v85
  %v279 = vpop.f32.mrf.mxu0
  %v280 = vadd.f32 %v50, %v279
  %281 = vmatmul.f32.gmra.mxu0 %v88
  %v282 = vpop.f32.mrf.mxu0
  %v283 = vadd.f32 %v50, %v282
  %284 = vmatmul.f32.gmra.mxu0 %v91
  %v285 = vpop.f32.mrf.mxu0
  %v286 = vadd.f32 %v50, %v285
  %287 = vmatmul.f32.gmra.mxu0 %v94
  %v288 = vpop.f32.mrf.mxu0
  %v289 = vadd.f32 %v50, %v288
  %290 = vmatmul.f32.gmra.mxu0 %v97
  %v291 = vpop.f32.mrf.mxu0
  %v292 = vadd.f32 %v50, %v291
  %293 = vmatmul.f32.gmra.mxu0 %v100
  %v294 = vpop.f32.mrf.mxu0
  %v295 = vadd.f32 %v50, %v294
  %296 = vmatmul.f32.gmra.mxu0 %v103
  %v297 = vpop.f32.mrf.mxu0
  %v298 = vadd.f32 %v50, %v297
  %299 = vdwg.mxu0
  %300 = vmatpush.msra.mxu0 0.0
  %301 = vmatpush.msra.mxu0 0.0
  %302 = vmatpush.msra.mxu0 0.0
  %303 = vmatpush.msra.mxu0 0.0
  %304 = vmatpush.msra.mxu0 0.0
  %305 = vmatpush.msra.mxu0 0.0
  %306 = vmatpush.msra.mxu0 0.0
  %307 = vmatpush.msra.mxu0 0.0
  %308 = vmatpush.msra.mxu0 0.0
  %309 = vmatpush.msra.mxu0 0.0
  %310 = vmatpush.msra.mxu0 0.0
  %311 = vmatpush.msra.mxu0 0.0
  %312 = vmatpush.msra.mxu0 %v45
  %313 = vmatpush.msra.mxu0 %v41
  %314 = vmatpush.msra.mxu0 %v37
  %315 = vmatpush.msra.mxu0 %v33
  %316 = vmatmul.f32.gmra.mxu0 %v58
  %v317 = vpop.f32.mrf.mxu0
  %v318 = vadd.f32 %v51, %v317
  %319 = vmatmul.f32.gmra.mxu0 %v61
  %v320 = vpop.f32.mrf.mxu0
  %v321 = vadd.f32 %v51, %v320
  %322 = vmatmul.f32.gmra.mxu0 %v64
  %v323 = vpop.f32.mrf.mxu0
  %v324 = vadd.f32 %v51, %v323
  %325 = vmatmul.f32.gmra.mxu0 %v67
  %v326 = vpop.f32.mrf.mxu0
  %v327 = vadd.f32 %v51, %v326
  %328 = vmatmul.f32.gmra.mxu0 %v70
  %v329 = vpop.f32.mrf.mxu0
  %v330 = vadd.f32 %v51, %v329
  %331 = vmatmul.f32.gmra.mxu0 %v73
  %v332 = vpop.f32.mrf.mxu0
  %v333 = vadd.f32 %v51, %v332
  %334 = vmatmul.f32.gmra.mxu0 %v76
  %v335 = vpop.f32.mrf.mxu0
  %v336 = vadd.f32 %v51, %v335
  %337 = vmatmul.f32.gmra.mxu0 %v79
  %v338 = vpop.f32.mrf.mxu0
  %v339 = vadd.f32 %v51, %v338
  %340 = vmatmul.f32.gmra.mxu0 %v82
  %v341 = vpop.f32.mrf.mxu0
  %v342 = vadd.f32 %v51, %v341
  %343 = vmatmul.f32.gmra.mxu0 %v85
  %v344 = vpop.f32.mrf.mxu0
  %v345 = vadd.f32 %v51, %v344
  %346 = vmatmul.f32.gmra.mxu0 %v88
  %v347 = vpop.f32.mrf.mxu0
  %v348 = vadd.f32 %v51, %v347
  %349 = vmatmul.f32.gmra.mxu0 %v91
  %v350 = vpop.f32.mrf.mxu0
  %v351 = vadd.f32 %v51, %v350
  %352 = vmatmul.f32.gmra.mxu0 %v94
  %v353 = vpop.f32.mrf.mxu0
  %v354 = vadd.f32 %v51, %v353
  %355 = vmatmul.f32.gmra.mxu0 %v97
  %v356 = vpop.f32.mrf.mxu0
  %v357 = vadd.f32 %v51, %v356
  %358 = vmatmul.f32.gmra.mxu0 %v100
  %v359 = vpop.f32.mrf.mxu0
  %v360 = vadd.f32 %v51, %v359
  %361 = vmatmul.f32.gmra.mxu0 %v103
  %v362 = vpop.f32.mrf.mxu0
  %v363 = vadd.f32 %v51, %v362
  %364 = vdwg.mxu0
  %365 = vst [vmem:[%s3] sm:$0xff] %v123
  %366 = vst [vmem:[%s3 + $0x8] sm:$0xff] %v188
  %367 = vst [vmem:[%s3 + $0x10] sm:$0xff] %v253
  %368 = vst [vmem:[%s3 + $0x18] sm:$0xff] %v318
  %369 = vst [vmem:[%s3 + $0x20] sm:$0xff] %v126
  %370 = vst [vmem:[%s3 + $0x28] sm:$0xff] %v191
  %371 = vst [vmem:[%s3 + $0x30] sm:$0xff] %v256
  %372 = vst [vmem:[%s3 + $0x38] sm:$0xff] %v321
  %373 = vst [vmem:[%s3 + $0x40] sm:$0xff] %v129
  %374 = vst [vmem:[%s3 + $0x48] sm:$0xff] %v194
  %375 = vst [vmem:[%s3 + $0x50] sm:$0xff] %v259
  %376 = vst [vmem:[%s3 + $0x58] sm:$0xff] %v324
  %377 = vst [vmem:[%s3 + $0x60] sm:$0xff] %v132
  %378 = vst [vmem:[%s3 + $0x68] sm:$0xff] %v197
  %379 = vst [vmem:[%s3 + $0x70] sm:$0xff] %v262
  %380 = vst [vmem:[%s3 + $0x78] sm:$0xff] %v327
  %381 = vst [vmem:[%s3 + $0x80] sm:$0xff] %v135
  %382 = vst [vmem:[%s3 + $0x88] sm:$0xff] %v200
  %383 = vst [vmem:[%s3 + $0x90] sm:$0xff] %v265
  %384 = vst [vmem:[%s3 + $0x98] sm:$0xff] %v330
  %385 = vst [vmem:[%s3 + $0xa0] sm:$0xff] %v138
  %386 = vst [vmem:[%s3 + $0xa8] sm:$0xff] %v203
  %387 = vst [vmem:[%s3 + $0xb0] sm:$0xff] %v268
  %388 = vst [vmem:[%s3 + $0xb8] sm:$0xff] %v333
  %389 = vst [vmem:[%s3 + $0xc0] sm:$0xff] %v141
  %390 = vst [vmem:[%s3 + $0xc8] sm:$0xff] %v206
  %391 = vst [vmem:[%s3 + $0xd0] sm:$0xff] %v271
  %392 = vst [vmem:[%s3 + $0xd8] sm:$0xff] %v336
  %393 = vst [vmem:[%s3 + $0xe0] sm:$0xff] %v144
  %394 = vst [vmem:[%s3 + $0xe8] sm:$0xff] %v209
  %395 = vst [vmem:[%s3 + $0xf0] sm:$0xff] %v274
  %396 = vst [vmem:[%s3 + $0xf8] sm:$0xff] %v339
  %397 = vst [vmem:[%s3 + $0x100] sm:$0xff] %v147
  %398 = vst [vmem:[%s3 + $0x108] sm:$0xff] %v212
  %399 = vst [vmem:[%s3 + $0x110] sm:$0xff] %v277
  %400 = vst [vmem:[%s3 + $0x118] sm:$0xff] %v342
  %401 = vst [vmem:[%s3 + $0x120] sm:$0xff] %v150
  %402 = vst [vmem:[%s3 + $0x128] sm:$0xff] %v215
  %403 = vst [vmem:[%s3 + $0x130] sm:$0xff] %v280
  %404 = vst [vmem:[%s3 + $0x138] sm:$0xff] %v345
  %405 = vst [vmem:[%s3 + $0x140] sm:$0xff] %v153
  %406 = vst [vmem:[%s3 + $0x148] sm:$0xff] %v218
  %407 = vst [vmem:[%s3 + $0x150] sm:$0xff] %v283
  %408 = vst [vmem:[%s3 + $0x158] sm:$0xff] %v348
  %409 = vst [vmem:[%s3 + $0x160] sm:$0xff] %v156
  %410 = vst [vmem:[%s3 + $0x168] sm:$0xff] %v221
  %411 = vst [vmem:[%s3 + $0x170] sm:$0xff] %v286
  %412 = vst [vmem:[%s3 + $0x178] sm:$0xff] %v351
  %413 = vst [vmem:[%s3 + $0x180] sm:$0xff] %v159
  %414 = vst [vmem:[%s3 + $0x188] sm:$0xff] %v224
  %415 = vst [vmem:[%s3 + $0x190] sm:$0xff] %v289
  %416 = vst [vmem:[%s3 + $0x198] sm:$0xff] %v354
  %417 = vst [vmem:[%s3 + $0x1a0] sm:$0xff] %v162
  %418 = vst [vmem:[%s3 + $0x1a8] sm:$0xff] %v227
  %419 = vst [vmem:[%s3 + $0x1b0] sm:$0xff] %v292
  %420 = vst [vmem:[%s3 + $0x1b8] sm:$0xff] %v357
  %421 = vst [vmem:[%s3 + $0x1c0] sm:$0xff] %v165
  %422 = vst [vmem:[%s3 + $0x1c8] sm:$0xff] %v230
  %423 = vst [vmem:[%s3 + $0x1d0] sm:$0xff] %v295
  %424 = vst [vmem:[%s3 + $0x1d8] sm:$0xff] %v360
  %425 = vst [vmem:[%s3 + $0x1e0] sm:$0xff] %v168
  %426 = vst [vmem:[%s3 + $0x1e8] sm:$0xff] %v233
  %427 = vst [vmem:[%s3 + $0x1f0] sm:$0xff] %v298
  %428 = vst [vmem:[%s3 + $0x1f8] sm:$0xff] %v363
  // Predicated region
  $region14: #{measure_model_forward.2} parent=0 // pred_check
    _
  $region15: #{measure_model_forward.2} parent=0 // pred_check_branch
    %430 = sbr.rel (0) target = $region17
  $region16: #{measure_model_forward.2} parent=0 // pred_region
    _
  $region17: #{measure_model_forward.2} parent=0 // pred_fallthru
    _
  // Predicated region
  $region18: #{measure_model_forward.2} parent=0 // pred_check
    _
  $region19: #{measure_model_forward.2} parent=0 // pred_check_branch
    %432 = sbr.rel (0) target = $region21
  $region20: #{measure_model_forward.2} parent=0 // pred_region
    _
  $region21: #{measure_model_forward.2} parent=0 // pred_fallthru
    _

</llo_original>
